<compile_context>
chip_gen: v6e
topology: v6e:2x2x1
jax: 0.10.0
libtpu: 0.0.40
codegen_flags: <defaults>
</compile_context>

<pallas_src>
import jax
import jax.numpy as jnp
from jax import lax
from jax.experimental import pallas as pl
from jax.experimental.pallas import tpu as pltpu


def _round_up(x, m):
    return ((x + m - 1) // m) * m


def _pick_tile_b():
    """Per-generation default batch tile (perf heuristic only)."""
    try:
        kind = jax.devices()[0].device_kind.lower()
    except Exception:
        return 4096
    if "v5" in kind:
        return 2048   # ~820 GB/s HBM: steps already long enough
    if "v6" in kind:
        return 4096   # ~1.4 TB/s
    if "7" in kind:
        return 8192   # ~3.2 TB/s: amortize per-step overhead
    return 4096


def _mlp_t_kernel(x_ref, w1t_ref, b1_ref, w2t_ref, b2_ref, out_ref):
    """One batch tile.

    x_ref   : (TB, 32)   input rows
    w1t_ref : (64, 32)   first-layer weight, transposed       (resident)
    b1_ref  : (64, 1)    first-layer bias, column             (resident)
    w2t_ref : (16, 64)   second-layer weight, transposed+pad  (resident)
    b2_ref  : (16, 1)    second-layer bias, column, padded    (resident)
    out_ref : (16, TB)   transposed output slab (rows >= 10 are pad)
    """
    # h^T = relu(W1^T @ x^T + b1): contract the 32-feature dim of both
    # operands (same "NT" dot_general pattern as q @ k^T in flash attention).
    h_t = lax.dot_general(
        w1t_ref[...], x_ref[...],
        dimension_numbers=(((1,), (1,)), ((), ())),
        preferred_element_type=jnp.float32)              # (64, TB) f32
    h_t = jnp.maximum(h_t + b1_ref[...], 0.0)
    # o^T = W2p^T @ h^T + b2  (plain matmul, no transposes).
    o_t = jnp.dot(w2t_ref[...], h_t.astype(w2t_ref.dtype),
                  preferred_element_type=jnp.float32)     # (16, TB) f32
    out_ref[...] = (o_t + b2_ref[...]).astype(out_ref.dtype)


def prepare_classifier_params(w1, b1, w2, b2, *, compute_dtype=jnp.float32):
    """Precompute the kernel-side parameter layout ONCE per parameter set.

    w1: (32, 64), b1: (64,), w2: (64, 10), b2: (10,)  (weights as (in, out)).
    Returns (w1t, b1_col, w2t_padded, b2_col_padded, n_out).
    """
    w1 = jnp.asarray(w1)
    w2 = jnp.asarray(w2)
    d_in, hidden = w1.shape
    n_out = w2.shape[1]
    n_out_pad = _round_up(max(n_out, 8), 8)              # 10 -> 16

    w1t = w1.astype(compute_dtype).T                      # (hidden, d_in)
    b1c = jnp.asarray(b1, dtype=jnp.float32).reshape(hidden, 1)

    w2t = jnp.zeros((n_out_pad, hidden), dtype=compute_dtype)
    w2t = w2t.at[:n_out, :].set(w2.astype(compute_dtype).T)
    b2c = jnp.zeros((n_out_pad, 1), dtype=jnp.float32)
    b2c = b2c.at[:n_out, 0].set(jnp.asarray(b2, dtype=jnp.float32).reshape(-1))
    return (w1t, b1c, w2t, b2c, n_out)


def classifier_forward(x, params, *, tile_b=None):
    """x: (B, 32) -> (B, 10) float32.  `params` from prepare_classifier_params."""
    w1t, b1c, w2t, b2c, n_out = params
    hidden, d_in = w1t.shape
    n_out_pad = w2t.shape[0]
    B = x.shape[0]

    x = jnp.asarray(x).astype(w1t.dtype)

    if tile_b is None:
        tile_b = _pick_tile_b()

    # Batch tile: multiple of 128 (it is the *lane* dim of the output slab).
    # No explicit padding of x and no padded output rows: pl.cdiv + masked
    # edge-block stores handle a ragged batch.  Garbage in OOB rows of the
    # edge x tile only reaches masked output lanes (row-wise computation).
    tb = max(128, min(int(tile_b), _round_up(B, 128)))
    n_steps = pl.cdiv(B, tb)
    if n_steps == 1 and B >= 256:
        n_steps = 2  # give both TensorCores work on megacore parts
    tb = _round_up(pl.cdiv(B, n_steps), 128)
    grid = (pl.cdiv(B, tb),)

    in_itemsize = jnp.dtype(x.dtype).itemsize
    cost = pl.CostEstimate(
        flops=2 * B * (d_in * hidden + hidden * n_out_pad),
        transcendentals=0,
        bytes_accessed=(
            B * d_in * in_itemsize                 # x
            + hidden * d_in * in_itemsize          # W1^T
            + hidden * 4                           # b1
            + n_out_pad * hidden * in_itemsize     # W2^T (padded)
            + n_out_pad * 4                        # b2 (padded)
            + n_out_pad * B * 4                    # transposed output slab
        ),
    )

    out_t = pl.pallas_call(
        _mlp_t_kernel,
        out_shape=jax.ShapeDtypeStruct((n_out_pad, B), jnp.float32),
        grid=grid,
        in_specs=[
            pl.BlockSpec((tb, d_in), lambda i: (i, 0)),           # x tile
            pl.BlockSpec((hidden, d_in), lambda i: (0, 0)),       # W1^T resident
            pl.BlockSpec((hidden, 1), lambda i: (0, 0)),          # b1   resident
            pl.BlockSpec((n_out_pad, hidden), lambda i: (0, 0)),  # W2^T resident
            pl.BlockSpec((n_out_pad, 1), lambda i: (0, 0)),       # b2   resident
        ],
        out_specs=pl.BlockSpec((n_out_pad, tb), lambda i: (0, i)),
        compiler_params=pltpu.CompilerParams(
            dimension_semantics=("parallel",),
        ),
        cost_estimate=cost,
    )(x, w1t, b1c, w2t, b2c)

    # Only a tiny (10, B) slice + transpose remains on the wrapper side.
    return out_t[:n_out, :].T


def classifier_apply(x, w1, b1, w2, b2, *, tile_b=None,
                     compute_dtype=jnp.float32):
    """One-shot convenience wrapper; for repeated calls, prepare params once."""
    params = prepare_classifier_params(w1, b1, w2, b2,
                                       compute_dtype=compute_dtype)
    return classifier_forward(x, params, tile_b=tile_b)


def _reference_forward(x, w1, b1, w2, b2):
    h = jnp.maximum(x @ w1 + b1.reshape(1, -1), 0.0)
    return h @ w2 + b2.reshape(1, -1)


if __name__ == "__main__":
    key = jax.random.PRNGKey(0)
    kx, kw1, kb1, kw2, kb2, kx2 = jax.random.split(key, 6)

    # Parameter shapes from the module's __init__ (stored (in, out)):
    #   nn.Linear(32, 64): W1 (32, 64), b1 (64,)
    #   nn.Linear(64, 10): W2 (64, 10), b2 (10,)
    w1 = jax.random.normal(kw1, (32, 64), dtype=jnp.float32) * 0.1
    b1 = jax.random.normal(kb1, (64,), dtype=jnp.float32) * 0.1
    w2 = jax.random.normal(kw2, (64, 10), dtype=jnp.float32) * 0.1
    b2 = jax.random.normal(kb2, (10,), dtype=jnp.float32) * 0.1

    # Hoisted once per parameter set; reused across calls below.
    params = prepare_classifier_params(w1, b1, w2, b2)

    # Small batch (as in the module's usage).
    batch = 8
    x = jax.random.normal(kx, (batch, 32), dtype=jnp.float32)
    out = jax.block_until_ready(classifier_forward(x, params))
    ref = _reference_forward(x, w1, b1, w2, b2)
    assert out.shape == (batch, 10), out.shape
    assert jnp.allclose(out, ref, atol=1e-4, rtol=1e-4), "mismatch vs reference (B=8)"

    # Ragged batch exercising the multi-step grid + masked edge block
    # (no explicit padding of x, no padded output columns written back).
    batch2 = 300
    x2 = jax.random.normal(kx2, (batch2, 32), dtype=jnp.float32)
    out2 = jax.block_until_ready(classifier_forward(x2, params, tile_b=128))
    ref2 = _reference_forward(x2, w1, b1, w2, b2)
    assert out2.shape == (batch2, 10), out2.shape
    assert jnp.allclose(out2, ref2, atol=1e-4, rtol=1e-4), "mismatch vs reference (B=300)"

    print("KERNEL_OK")
</pallas_src>

<mosaic_0001>
module attributes {stable_mosaic.version = 11 : i64} {
  func.func @_mlp_t_kernel(%arg0: i32, %arg1: memref<128x32xf32, #tpu.memory_space<vmem>>, %arg2: memref<64x32xf32, #tpu.memory_space<vmem>>, %arg3: memref<64x1xf32, #tpu.memory_space<vmem>>, %arg4: memref<16x64xf32, #tpu.memory_space<vmem>>, %arg5: memref<16x1xf32, #tpu.memory_space<vmem>>, %arg6: memref<16x128xf32, #tpu.memory_space<vmem>>) attributes {dimension_semantics = [#tpu.dimension_semantics<parallel>], iteration_bounds = array<i64: 1>, scalar_prefetch = 0 : i64, scratch_operands = 0 : i64, tpu.core_type = #tpu.core_type<tc>, window_params = [{transform_indices = @transform_0, window_bounds = array<i64: 128, 32>}, {pipeline_mode = #tpu.pipeline_mode<synchronous>, transform_indices = @transform_1, window_bounds = array<i64: 64, 32>}, {pipeline_mode = #tpu.pipeline_mode<synchronous>, transform_indices = @transform_2, window_bounds = array<i64: 64, 1>}, {pipeline_mode = #tpu.pipeline_mode<synchronous>, transform_indices = @transform_3, window_bounds = array<i64: 16, 64>}, {pipeline_mode = #tpu.pipeline_mode<synchronous>, transform_indices = @transform_4, window_bounds = array<i64: 16, 1>}, {transform_indices = @transform_5, window_bounds = array<i64: 16, 128>}]} {
    %c0 = arith.constant 0 : index
    %c0_0 = arith.constant 0 : index
    %0 = vector.load %arg2[%c0, %c0_0] : memref<64x32xf32, #tpu.memory_space<vmem>>, vector<64x32xf32>
    %c0_1 = arith.constant 0 : index
    %c0_2 = arith.constant 0 : index
    %1 = vector.load %arg1[%c0_1, %c0_2] : memref<128x32xf32, #tpu.memory_space<vmem>>, vector<128x32xf32>
    %cst = arith.constant dense<0.000000e+00> : vector<64x128xf32>
    %2 = tpu.matmul %0, %1, %cst {dimension_numbers = #tpu.dot_dimension_numbers<[1], [1], [0], [0], [0, 0, 1, 0], [], []>} : vector<64x32xf32>, vector<128x32xf32>, vector<64x128xf32> -> vector<64x128xf32>
    %c0_3 = arith.constant 0 : index
    %c0_4 = arith.constant 0 : index
    %3 = vector.load %arg3[%c0_3, %c0_4] : memref<64x1xf32, #tpu.memory_space<vmem>>, vector<64x1xf32>
    %4 = vector.broadcast %3 : vector<64x1xf32> to vector<64x128xf32>
    %5 = arith.addf %2, %4 : vector<64x128xf32>
    %cst_5 = arith.constant 0.000000e+00 : f32
    %6 = vector.broadcast %cst_5 : f32 to vector<64x128xf32>
    %7 = arith.maximumf %5, %6 : vector<64x128xf32>
    %c0_6 = arith.constant 0 : index
    %c0_7 = arith.constant 0 : index
    %8 = vector.load %arg4[%c0_6, %c0_7] : memref<16x64xf32, #tpu.memory_space<vmem>>, vector<16x64xf32>
    %cst_8 = arith.constant dense<0.000000e+00> : vector<16x128xf32>
    %9 = tpu.matmul %8, %7, %cst_8 {dimension_numbers = #tpu.dot_dimension_numbers<[1], [0], [0], [1], [0, 0, 1, 1], [], []>} : vector<16x64xf32>, vector<64x128xf32>, vector<16x128xf32> -> vector<16x128xf32>
    %c0_9 = arith.constant 0 : index
    %c0_10 = arith.constant 0 : index
    %10 = vector.load %arg5[%c0_9, %c0_10] : memref<16x1xf32, #tpu.memory_space<vmem>>, vector<16x1xf32>
    %11 = vector.broadcast %10 : vector<16x1xf32> to vector<16x128xf32>
    %12 = arith.addf %9, %11 : vector<16x128xf32>
    %c0_11 = arith.constant 0 : index
    %c0_12 = arith.constant 0 : index
    %13 = vector.load %arg6[%c0_11, %c0_12] : memref<16x128xf32, #tpu.memory_space<vmem>>, vector<16x128xf32>
    tpu.vector_store %arg6[%c0_11, %c0_12], %12 {strides = array<i32>} : memref<16x128xf32, #tpu.memory_space<vmem>>, vector<16x128xf32>,
    return
  }
  func.func @transform_0(%arg0: i32) -> (i32, i32) {
    %c0_i32 = arith.constant 0 : i32
    %c0_i32_0 = arith.constant 0 : i32
    return %arg0, %c0_i32 : i32, i32
  }
  func.func @transform_1(%arg0: i32) -> (i32, i32) {
    %c0_i32 = arith.constant 0 : i32
    %c0_i32_0 = arith.constant 0 : i32
    %c0_i32_1 = arith.constant 0 : i32
    return %c0_i32, %c0_i32_0 : i32, i32
  }
  func.func @transform_2(%arg0: i32) -> (i32, i32) {
    %c0_i32 = arith.constant 0 : i32
    %c0_i32_0 = arith.constant 0 : i32
    %c0_i32_1 = arith.constant 0 : i32
    return %c0_i32, %c0_i32_0 : i32, i32
  }
  func.func @transform_3(%arg0: i32) -> (i32, i32) {
    %c0_i32 = arith.constant 0 : i32
    %c0_i32_0 = arith.constant 0 : i32
    %c0_i32_1 = arith.constant 0 : i32
    return %c0_i32, %c0_i32_0 : i32, i32
  }
  func.func @transform_4(%arg0: i32) -> (i32, i32) {
    %c0_i32 = arith.constant 0 : i32
    %c0_i32_0 = arith.constant 0 : i32
    %c0_i32_1 = arith.constant 0 : i32
    return %c0_i32, %c0_i32_0 : i32, i32
  }
  func.func @transform_5(%arg0: i32) -> (i32, i32) {
    %c0_i32 = arith.constant 0 : i32
    %c0_i32_0 = arith.constant 0 : i32
    return %c0_i32, %arg0 : i32, i32
  }
}

</mosaic_0001>

<llo_original>
// kernel: tpu_custom_call.1
$region0: #{tpu_custom_call.1}
  #allocation0 [shape = 'u32[]', space=smem, size = 0x4, offset = 0x4, fixed_abs, tag = 'smem constant byte address 0x4 - core index']
  #allocation1 [shape = 'u32[144,128]{1,0:T(1,128)}', space=vmem, size = 0x12000, scoped, tag = 'internal scratch']
  %s0 = inlined_call_operand.vmem [shape: f32[8,32], index: 0, kind: input, shape index: {}]
  %s1 = inlined_call_operand.vmem [shape: f32[64,32], index: 1, kind: input, shape index: {}]
  %s2 = inlined_call_operand.vmem [shape: f32[64,1], index: 2, kind: input, shape index: {}]
  %s3 = inlined_call_operand.vmem [shape: f32[16,64], index: 3, kind: input, shape index: {}]
  %s4 = inlined_call_operand.vmem [shape: f32[16,1], index: 4, kind: input, shape index: {}]
  %s5 = inlined_call_operand.vmem [shape: f32[16,8], index: 5, kind: output, shape index: {}]
  %s6 = sld [smem:[#allocation0]]
  $region30: #{tpu_custom_call.1} parent=0
    _
  %s8 = ssub.s32 1, %s6
  %s9 = scalar_select 0, %s8, %s6
  // Predicated region
  $region2: #{tpu_custom_call.1} parent=0 // pred_check
    _
  $region3: #{tpu_custom_call.1} parent=0 // pred_check_branch
    %11 = sbr.rel (0) target = $region5
  $region4: #{tpu_custom_call.1} parent=0 // pred_region
    _
  $region5: #{tpu_custom_call.1} parent=0 // pred_fallthru
    _
  // Predicated region
  $region6: #{tpu_custom_call.1} parent=0 // pred_check
    _
  $region7: #{tpu_custom_call.1} parent=0 // pred_check_branch
    %13 = sbr.rel (0) target = $region9
  $region8: #{tpu_custom_call.1} parent=0 // pred_region
    _
  $region9: #{tpu_custom_call.1} parent=0 // pred_fallthru
    _
  // Predicated region
  $region10: #{tpu_custom_call.1} parent=0 // pred_check
    _
  $region11: #{tpu_custom_call.1} parent=0 // pred_check_branch
    %15 = sbr.rel (0) target = $region13
  $region12: #{tpu_custom_call.1} parent=0 // pred_region
    _
  $region13: #{tpu_custom_call.1} parent=0 // pred_fallthru
    _
  // Predicated region
  $region14: #{tpu_custom_call.1} parent=0 // pred_check
    _
  $region15: #{tpu_custom_call.1} parent=0 // pred_check_branch
    %17 = sbr.rel (0) target = $region17
  $region16: #{tpu_custom_call.1} parent=0 // pred_region
    _
  $region17: #{tpu_custom_call.1} parent=0 // pred_fallthru
    _
  // Predicated region
  $region18: #{tpu_custom_call.1} parent=0 // pred_check
    _
  $region19: #{tpu_custom_call.1} parent=0 // pred_check_branch
    %19 = sbr.rel (0) target = $region21
  $region20: #{tpu_custom_call.1} parent=0 // pred_region
    _
  $region21: #{tpu_custom_call.1} parent=0 // pred_fallthru
    _
  %v20 = vld [vmem:[%s1] sm:$0xff]
  %v21 = vld [vmem:[%s1 + $0x8] sm:$0xff]
  %v22 = vld [vmem:[%s1 + $0x10] sm:$0xff]
  %v23 = vld [vmem:[%s1 + $0x18] sm:$0xff]
  %v24 = vld [vmem:[%s1 + $0x20] sm:$0xff]
  %v25 = vld [vmem:[%s1 + $0x28] sm:$0xff]
  %v26 = vld [vmem:[%s1 + $0x30] sm:$0xff]
  %v27 = vld [vmem:[%s1 + $0x38] sm:$0xff]
  %v28 = vld [vmem:[%s0] sm:$0xff]
  %v29 = vld [vmem:[%s0 + $0x8] sm:$0xff]
  %v30 = vld [vmem:[%s0 + $0x10] sm:$0xff]
  %v31 = vld [vmem:[%s0 + $0x18] sm:$0xff]
  %v32 = vld [vmem:[%s0 + $0x20] sm:$0xff]
  %v33 = vld [vmem:[%s0 + $0x28] sm:$0xff]
  %v34 = vld [vmem:[%s0 + $0x30] sm:$0xff]
  %v35 = vld [vmem:[%s0 + $0x38] sm:$0xff]
  %v36 = vld [vmem:[%s0 + $0x40] sm:$0xff]
  %v37 = vld [vmem:[%s0 + $0x48] sm:$0xff]
  %v38 = vld [vmem:[%s0 + $0x50] sm:$0xff]
  %v39 = vld [vmem:[%s0 + $0x58] sm:$0xff]
  %v40 = vld [vmem:[%s0 + $0x60] sm:$0xff]
  %v41 = vld [vmem:[%s0 + $0x68] sm:$0xff]
  %v42 = vld [vmem:[%s0 + $0x70] sm:$0xff]
  %v43 = vld [vmem:[%s0 + $0x78] sm:$0xff]
  %v44 = vld [vmem:[%s2] sm:$0xff]
  %v45 = vld [vmem:[%s2 + $0x8] sm:$0xff]
  %v46 = vld [vmem:[%s2 + $0x10] sm:$0xff]
  %v47 = vld [vmem:[%s2 + $0x18] sm:$0xff]
  %v48 = vld [vmem:[%s2 + $0x20] sm:$0xff]
  %v49 = vld [vmem:[%s2 + $0x28] sm:$0xff]
  %v50 = vld [vmem:[%s2 + $0x30] sm:$0xff]
  %v51 = vld [vmem:[%s2 + $0x38] sm:$0xff]
  %53 = vset.pattern.permute.xlu0 0
  %54 = vperm.xlu0 %53, %v44
  %v55 = vpop.permute.xlu0 %54
  %58 = vset.pattern.permute.xlu0 0
  %59 = vperm.xlu0 %58, %v45
  %v60 = vpop.permute.xlu0 %59
  %63 = vset.pattern.permute.xlu0 0
  %64 = vperm.xlu0 %63, %v46
  %v65 = vpop.permute.xlu0 %64
  %68 = vset.pattern.permute.xlu0 0
  %69 = vperm.xlu0 %68, %v47
  %v70 = vpop.permute.xlu0 %69
  %73 = vset.pattern.permute.xlu0 0
  %74 = vperm.xlu0 %73, %v48
  %v75 = vpop.permute.xlu0 %74
  %78 = vset.pattern.permute.xlu0 0
  %79 = vperm.xlu0 %78, %v49
  %v80 = vpop.permute.xlu0 %79
  %83 = vset.pattern.permute.xlu0 0
  %84 = vperm.xlu0 %83, %v50
  %v85 = vpop.permute.xlu0 %84
  %88 = vset.pattern.permute.xlu0 0
  %89 = vperm.xlu0 %88, %v51
  %v90 = vpop.permute.xlu0 %89
  %vm92 = vcmask 261120
  %v94 = vsel %vm92, %v20, 0
  %v97 = vsel %vm92, %v21, 0
  %v100 = vsel %vm92, %v22, 0
  %v103 = vsel %vm92, %v23, 0
  %v106 = vsel %vm92, %v24, 0
  %v109 = vsel %vm92, %v25, 0
  %v112 = vsel %vm92, %v26, 0
  %v115 = vsel %vm92, %v27, 0
  %v118 = vsel %vm92, %v28, 0
  %v121 = vsel %vm92, %v29, 0
  %v124 = vsel %vm92, %v30, 0
  %v127 = vsel %vm92, %v31, 0
  %v130 = vsel %vm92, %v32, 0
  %v133 = vsel %vm92, %v33, 0
  %v136 = vsel %vm92, %v34, 0
  %v139 = vsel %vm92, %v35, 0
  %v142 = vsel %vm92, %v36, 0
  %v145 = vsel %vm92, %v37, 0
  %v148 = vsel %vm92, %v38, 0
  %v151 = vsel %vm92, %v39, 0
  %v154 = vsel %vm92, %v40, 0
  %v157 = vsel %vm92, %v41, 0
  %v160 = vsel %vm92, %v42, 0
  %v163 = vsel %vm92, %v43, 0
  %165 = vmatprep.subr.mxu0 0.0
  %166 = vmatpush1.xpose.msra.mxu0 %v163
  %167 = vmatprep.subr.mxu0 0.0
  %168 = vmatpush1.xpose.msra.mxu0 %v160
  %169 = vmatprep.subr.mxu0 0.0
  %170 = vmatpush1.xpose.msra.mxu0 %v157
  %171 = vmatprep.subr.mxu0 0.0
  %172 = vmatpush1.xpose.msra.mxu0 %v154
  %173 = vmatprep.subr.mxu0 0.0
  %174 = vmatpush1.xpose.msra.mxu0 %v151
  %175 = vmatprep.subr.mxu0 0.0
  %176 = vmatpush1.xpose.msra.mxu0 %v148
  %177 = vmatprep.subr.mxu0 0.0
  %178 = vmatpush1.xpose.msra.mxu0 %v145
  %179 = vmatprep.subr.mxu0 0.0
  %180 = vmatpush1.xpose.msra.mxu0 %v142
  %181 = vmatprep.subr.mxu0 0.0
  %182 = vmatpush1.xpose.msra.mxu0 %v139
  %183 = vmatprep.subr.mxu0 0.0
  %184 = vmatpush1.xpose.msra.mxu0 %v136
  %185 = vmatprep.subr.mxu0 0.0
  %186 = vmatpush1.xpose.msra.mxu0 %v133
  %187 = vmatprep.subr.mxu0 0.0
  %188 = vmatpush1.xpose.msra.mxu0 %v130
  %189 = vmatprep.subr.mxu0 0.0
  %190 = vmatpush1.xpose.msra.mxu0 %v127
  %191 = vmatprep.subr.mxu0 0.0
  %192 = vmatpush1.xpose.msra.mxu0 %v124
  %193 = vmatprep.subr.mxu0 0.0
  %194 = vmatpush1.xpose.msra.mxu0 %v121
  %195 = vmatprep.subr.mxu0 0.0
  %196 = vmatpush1.xpose.msra.mxu0 %v118
  %197 = vmatprep.subr.mxu0 0.0
  %198 = vmatpush2.xpose.msra.mxu0 0.0
  %199 = vmatprep.subr.mxu0 0.0
  %200 = vmatpush2.xpose.msra.mxu0 0.0
  %201 = vmatprep.subr.mxu0 0.0
  %202 = vmatpush2.xpose.msra.mxu0 0.0
  %203 = vmatprep.subr.mxu0 0.0
  %204 = vmatpush2.xpose.msra.mxu0 0.0
  %205 = vmatprep.subr.mxu0 0.0
  %206 = vmatpush2.xpose.msra.mxu0 0.0
  %207 = vmatprep.subr.mxu0 0.0
  %208 = vmatpush2.xpose.msra.mxu0 0.0
  %209 = vmatprep.subr.mxu0 0.0
  %210 = vmatpush2.xpose.msra.mxu0 0.0
  %211 = vmatprep.subr.mxu0 0.0
  %212 = vmatpush2.xpose.msra.mxu0 0.0
  %213 = vmatprep.subr.mxu0 0.0
  %214 = vmatpush2.xpose.msra.mxu0 0.0
  %215 = vmatprep.subr.mxu0 0.0
  %216 = vmatpush2.xpose.msra.mxu0 0.0
  %217 = vmatprep.subr.mxu0 0.0
  %218 = vmatpush2.xpose.msra.mxu0 0.0
  %219 = vmatprep.subr.mxu0 0.0
  %220 = vmatpush2.xpose.msra.mxu0 0.0
  %221 = vmatprep.subr.mxu0 0.0
  %222 = vmatpush2.xpose.msra.mxu0 0.0
  %223 = vmatprep.subr.mxu0 0.0
  %224 = vmatpush2.xpose.msra.mxu0 0.0
  %225 = vmatprep.subr.mxu0 0.0
  %226 = vmatpush2.xpose.msra.mxu0 0.0
  %227 = vmatprep.subr.mxu0 0.0
  %228 = vmatpush2.xpose.msra.mxu0 0.0
  %229 = vmatprep.mubr.f32.mxu0 0.0
  %230 = vmatmul.mubr.f32.gmra.mxu0 %v94
  %v231 = vpop.f32.mrf.mxu0
  %v232 = vadd.f32 %v55, %v231
  %v233 = vpop.f32.mrf.mxu0
  %234 = vmatprep.mubr.f32.mxu0 0.0
  %235 = vmatmul.mubr.f32.gmra.mxu0 %v97
  %v236 = vpop.f32.mrf.mxu0
  %v237 = vadd.f32 %v60, %v236
  %v238 = vpop.f32.mrf.mxu0
  %239 = vmatprep.mubr.f32.mxu0 0.0
  %240 = vmatmul.mubr.f32.gmra.mxu0 %v100
  %v241 = vpop.f32.mrf.mxu0
  %v242 = vadd.f32 %v65, %v241
  %v243 = vpop.f32.mrf.mxu0
  %244 = vmatprep.mubr.f32.mxu0 0.0
  %245 = vmatmul.mubr.f32.gmra.mxu0 %v103
  %v246 = vpop.f32.mrf.mxu0
  %v247 = vadd.f32 %v70, %v246
  %v248 = vpop.f32.mrf.mxu0
  %249 = vmatprep.mubr.f32.mxu0 0.0
  %250 = vmatmul.mubr.f32.gmra.mxu0 %v106
  %v251 = vpop.f32.mrf.mxu0
  %v252 = vadd.f32 %v75, %v251
  %v253 = vpop.f32.mrf.mxu0
  %254 = vmatprep.mubr.f32.mxu0 0.0
  %255 = vmatmul.mubr.f32.gmra.mxu0 %v109
  %v256 = vpop.f32.mrf.mxu0
  %v257 = vadd.f32 %v80, %v256
  %v258 = vpop.f32.mrf.mxu0
  %259 = vmatprep.mubr.f32.mxu0 0.0
  %260 = vmatmul.mubr.f32.gmra.mxu0 %v112
  %v261 = vpop.f32.mrf.mxu0
  %v262 = vadd.f32 %v85, %v261
  %v263 = vpop.f32.mrf.mxu0
  %264 = vmatprep.mubr.f32.mxu0 0.0
  %265 = vmatmul.mubr.f32.gmra.mxu0 %v115
  %v266 = vpop.f32.mrf.mxu0
  %v267 = vadd.f32 %v90, %v266
  %v268 = vpop.f32.mrf.mxu0
  %269 = vdwg.mxu0
  %v270 = vmax.f32 %v232, 0.0
  %v271 = vmax.f32 %v237, 0.0
  %v272 = vmax.f32 %v242, 0.0
  %v273 = vmax.f32 %v247, 0.0
  %v274 = vmax.f32 %v252, 0.0
  %v275 = vmax.f32 %v257, 0.0
  %v276 = vmax.f32 %v262, 0.0
  %v277 = vmax.f32 %v267, 0.0
  %v278 = vld [vmem:[%s3] sm:$0xff]
  %v279 = vld [vmem:[%s3 + $0x8] sm:$0xff]
  %v280 = vld [vmem:[%s4] sm:$0xff]
  %v281 = vld [vmem:[%s4 + $0x8] sm:$0xff]
  %283 = vset.pattern.permute.xlu0 0
  %284 = vperm.xlu0 %283, %v280
  %v285 = vpop.permute.xlu0 %284
  %288 = vset.pattern.permute.xlu0 0
  %289 = vperm.xlu0 %288, %v281
  %v290 = vpop.permute.xlu0 %289
  %vm292 = vcmask 523264
  %v294 = vsel %vm292, %v278, 0
  %v297 = vsel %vm292, %v279, 0
  %299 = vmatprep.subr.mxu0 0.0
  %300 = vmatpush1.msra.mxu0 0.0
  %301 = vmatprep.subr.mxu0 0.0
  %302 = vmatpush1.msra.mxu0 0.0
  %303 = vmatprep.subr.mxu0 0.0
  %304 = vmatpush1.msra.mxu0 0.0
  %305 = vmatprep.subr.mxu0 0.0
  %306 = vmatpush1.msra.mxu0 0.0
  %307 = vmatprep.subr.mxu0 0.0
  %308 = vmatpush1.msra.mxu0 0.0
  %309 = vmatprep.subr.mxu0 0.0
  %310 = vmatpush1.msra.mxu0 0.0
  %311 = vmatprep.subr.mxu0 0.0
  %312 = vmatpush1.msra.mxu0 0.0
  %313 = vmatprep.subr.mxu0 0.0
  %314 = vmatpush1.msra.mxu0 0.0
  %315 = vmatprep.subr.mxu0 0.0
  %316 = vmatpush1.msra.mxu0 %v277
  %317 = vmatprep.subr.mxu0 0.0
  %318 = vmatpush1.msra.mxu0 %v276
  %319 = vmatprep.subr.mxu0 0.0
  %320 = vmatpush1.msra.mxu0 %v275
  %321 = vmatprep.subr.mxu0 0.0
  %322 = vmatpush1.msra.mxu0 %v274
  %323 = vmatprep.subr.mxu0 0.0
  %324 = vmatpush1.msra.mxu0 %v273
  %325 = vmatprep.subr.mxu0 0.0
  %326 = vmatpush1.msra.mxu0 %v272
  %327 = vmatprep.subr.mxu0 0.0
  %328 = vmatpush1.msra.mxu0 %v271
  %329 = vmatprep.subr.mxu0 0.0
  %330 = vmatpush1.msra.mxu0 %v270
  %331 = vmatprep.subr.mxu0 0.0
  %332 = vmatpush2.msra.mxu0 0.0
  %333 = vmatprep.subr.mxu0 0.0
  %334 = vmatpush2.msra.mxu0 0.0
  %335 = vmatprep.subr.mxu0 0.0
  %336 = vmatpush2.msra.mxu0 0.0
  %337 = vmatprep.subr.mxu0 0.0
  %338 = vmatpush2.msra.mxu0 0.0
  %339 = vmatprep.subr.mxu0 0.0
  %340 = vmatpush2.msra.mxu0 0.0
  %341 = vmatprep.subr.mxu0 0.0
  %342 = vmatpush2.msra.mxu0 0.0
  %343 = vmatprep.subr.mxu0 0.0
  %344 = vmatpush2.msra.mxu0 0.0
  %345 = vmatprep.subr.mxu0 0.0
  %346 = vmatpush2.msra.mxu0 0.0
  %347 = vmatprep.subr.mxu0 0.0
  %348 = vmatpush2.msra.mxu0 0.0
  %349 = vmatprep.subr.mxu0 0.0
  %350 = vmatpush2.msra.mxu0 0.0
  %351 = vmatprep.subr.mxu0 0.0
  %352 = vmatpush2.msra.mxu0 0.0
  %353 = vmatprep.subr.mxu0 0.0
  %354 = vmatpush2.msra.mxu0 0.0
  %355 = vmatprep.subr.mxu0 0.0
  %356 = vmatpush2.msra.mxu0 0.0
  %357 = vmatprep.subr.mxu0 0.0
  %358 = vmatpush2.msra.mxu0 0.0
  %359 = vmatprep.subr.mxu0 0.0
  %360 = vmatpush2.msra.mxu0 0.0
  %361 = vmatprep.subr.mxu0 0.0
  %362 = vmatpush2.msra.mxu0 0.0
  %363 = vmatprep.mubr.f32.mxu0 0.0
  %364 = vmatmul.mubr.f32.gmra.mxu0 %v294
  %v365 = vpop.f32.mrf.mxu0
  %v366 = vadd.f32 %v285, %v365
  %v367 = vpop.f32.mrf.mxu0
  %368 = vmatprep.mubr.f32.mxu0 0.0
  %369 = vmatmul.mubr.f32.gmra.mxu0 %v297
  %v370 = vpop.f32.mrf.mxu0
  %v371 = vadd.f32 %v290, %v370
  %v372 = vpop.f32.mrf.mxu0
  %373 = vdwg.mxu0
  %374 = vst [vmem:[%s5] sm:$0xff] %v366
  %375 = vst [vmem:[%s5 + $0x8] sm:$0xff] %v371
  // Predicated region
  $region22: #{tpu_custom_call.1} parent=0 // pred_check
    _
  $region23: #{tpu_custom_call.1} parent=0 // pred_check_branch
    %377 = sbr.rel (0) target = $region25
  $region24: #{tpu_custom_call.1} parent=0 // pred_region
    _
  $region25: #{tpu_custom_call.1} parent=0 // pred_fallthru
    _
  // Predicated region
  $region26: #{tpu_custom_call.1} parent=0 // pred_check
    _
  $region27: #{tpu_custom_call.1} parent=0 // pred_check_branch
    %379 = sbr.rel (0) target = $region29
  $region28: #{tpu_custom_call.1} parent=0 // pred_region
    _
  $region29: #{tpu_custom_call.1} parent=0 // pred_fallthru
    _

</llo_original>
